<compile_context>
chip_gen: v7x
topology: tpu7x:2x2x1
jax: 0.10.0
libtpu: 0.0.40
codegen_flags: <defaults>
</compile_context>

<pallas_src>
import functools

import jax
import jax.numpy as jnp
from jax.experimental import pallas as pl
from jax.experimental.pallas import tpu as pltpu


def _round_up(x, m):
    return ((x + m - 1) // m) * m


def _is_v7x():
    """Best-effort chip detection (2 TensorCores / faster HBM on v7x)."""
    try:
        kind = jax.devices()[0].device_kind.lower()
        return "v7" in kind
    except Exception:  # pragma: no cover - detection must never break the path
        return False


def _maybe_buffered_spec(block_shape, index_map, buffers):
    """BlockSpec with optional >2-deep pipelining (v7x); safe fallback."""
    if buffers <= 2:
        return pl.BlockSpec(block_shape, index_map)
    try:
        return pl.BlockSpec(block_shape, index_map, pipeline_mode=pl.Buffered(buffers))
    except TypeError:
        return pl.BlockSpec(block_shape, index_map)


# --------------------------------------------------------------------------
# Kernels
# --------------------------------------------------------------------------
def _fused_mlp_kernel(x_ref, w1_ref, b1_ref, w2_ref, b2_ref, out_ref, acc_ref, *, tk):
    """Single-core fused path.  Grid axis 0 tiles K; x is VMEM-resident and
    sliced in-kernel; acc_ref holds the f32 fc1 pre-activation (B, H) across
    K tiles; bias + ReLU + fc2 epilogue runs on the last tile."""
    k = pl.program_id(0)

    @pl.when(k == 0)
    def _():
        acc_ref[...] = jnp.zeros_like(acc_ref)

    start = pl.multiple_of(k * tk, 128)
    acc_ref[...] += jnp.dot(
        x_ref[:, pl.ds(start, tk)], w1_ref[...],
        preferred_element_type=jnp.float32,
    )

    @pl.when(k == pl.num_programs(0) - 1)
    def _():
        h = jnp.maximum(acc_ref[...] + b1_ref[...], 0.0)          # ReLU(fc1)
        # fc2 with output_size == 1: VPU multiply + lane reduction instead of
        # an N=1 MXU pass (w2 is passed as a (1, H) row).
        out = jnp.sum(h * w2_ref[...], axis=-1, keepdims=True) + b2_ref[...]
        out_ref[...] = out.astype(out_ref.dtype)


def _partial_fc1_kernel(x_ref, w1_ref, hpart_ref, acc_ref, *, tk, steps):
    """K-sharded partial fc1 (v7x dual-core path).
    grid = (k_shards 'parallel', K-steps 'arbitrary')."""
    c = pl.program_id(0)
    k = pl.program_id(1)

    @pl.when(k == 0)
    def _():
        acc_ref[...] = jnp.zeros_like(acc_ref)

    start = pl.multiple_of((c * steps + k) * tk, 128)
    acc_ref[...] += jnp.dot(
        x_ref[:, pl.ds(start, tk)], w1_ref[...],
        preferred_element_type=jnp.float32,
    )

    @pl.when(k == pl.num_programs(1) - 1)
    def _():
        hpart_ref[...] = acc_ref[...]


# --------------------------------------------------------------------------
# One-time weight preparation (do NOT call per forward)
# --------------------------------------------------------------------------
def prepare_weights(w1_t, b1, w2_t, b2, *, tk=8192,
                    stream_dtype=jnp.bfloat16, k_shards=None):
    """w1_t: (K, H); b1: (H,); w2_t: (H, 1); b2: (1,).

    Pads W1's K dimension to a tile multiple (zero rows are matmul-neutral),
    casts it to the streaming dtype, and reshapes/casts the small params.
    Call once at model-load time; the forward only touches x per call."""
    if k_shards is None:
        k_shards = 2 if _is_v7x() else 1
    assert k_shards >= 1

    K, H = w1_t.shape
    Hw, O = w2_t.shape
    assert H == Hw
    assert O == 1, "BinaryClassifier spec has output_size == 1"

    tk = max(128, (int(tk) // 128) * 128)                  # lane-aligned tile
    tk = min(tk, _round_up(pl.cdiv(K, k_shards), 128))     # don't overshoot K
    steps = pl.cdiv(K, tk * k_shards)                      # K steps per shard
    Kp = steps * tk * k_shards

    w1_p = jnp.pad(w1_t, ((0, Kp - K), (0, 0))) if Kp != K else w1_t
    return dict(
        w1=w1_p.astype(stream_dtype),
        b1=b1.reshape(1, H).astype(jnp.float32),
        w2=w2_t.reshape(1, H).astype(jnp.float32),          # (H,1) -> row (1,H)
        b2=b2.reshape(1, O).astype(jnp.float32),
        tk=tk, steps=steps, k_shards=k_shards, K=K, Kp=Kp, H=H, O=O,
        stream_dtype=stream_dtype,
    )


# --------------------------------------------------------------------------
# Forward
# --------------------------------------------------------------------------
def binary_classifier_forward(x, params):
    """x: (B, K).  params: output of prepare_weights()."""
    B, K = x.shape
    assert K == params["K"]
    tk, steps, k_shards = params["tk"], params["steps"], params["k_shards"]
    Kp, H, O = params["Kp"], params["H"], params["O"]
    stream_dtype = params["stream_dtype"]
    w1, b1, w2, b2 = params["w1"], params["b1"], params["w2"], params["b2"]
    out_dtype = x.dtype

    # Per-call input prep only (weights were prepped once).
    x_s = x.astype(stream_dtype)
    if Kp != K:
        x_s = jnp.pad(x_s, ((0, 0), (0, Kp - K)))

    itemsize = jnp.dtype(stream_dtype).itemsize
    out_itemsize = jnp.dtype(out_dtype).itemsize
    v7x = _is_v7x()
    w1_buffers = 3 if v7x else 2
    cparams = lambda sem: pltpu.CompilerParams(
        dimension_semantics=sem,
        vmem_limit_bytes=32 * 1024 * 1024,   # load-bearing on v5e (16 MiB default)
    )

    if k_shards == 1:
        # Single fused kernel: fc1 accumulation + bias + ReLU + fc2 epilogue.
        cost = pl.CostEstimate(
            flops=2 * B * Kp * H + 2 * B * H,
            transcendentals=0,
            bytes_accessed=(B * Kp + Kp * H) * itemsize
                           + 4 * (2 * H + O) + out_itemsize * B * O,
        )
        return pl.pallas_call(
            functools.partial(_fused_mlp_kernel, tk=tk),
            out_shape=jax.ShapeDtypeStruct((B, O), out_dtype),
            grid=(steps,),
            in_specs=[
                pl.BlockSpec((B, Kp), lambda k: (0, 0)),          # x (VMEM-resident)
                _maybe_buffered_spec((tk, H), lambda k: (k, 0), w1_buffers),  # W1 stream
                pl.BlockSpec((1, H), lambda k: (0, 0)),           # b1 (resident)
                pl.BlockSpec((1, H), lambda k: (0, 0)),           # w2 row (resident)
                pl.BlockSpec((1, O), lambda k: (0, 0)),           # b2 (resident)
            ],
            out_specs=pl.BlockSpec((B, O), lambda k: (0, 0)),
            scratch_shapes=[pltpu.VMEM((B, H), jnp.float32)],
            compiler_params=cparams(("arbitrary",)),
            cost_estimate=cost,
        )(x_s, w1, b1, w2, b2)

    # ---- dual-TensorCore path (v7x): K split across a 'parallel' axis ------
    cost_partial = pl.CostEstimate(
        flops=2 * B * Kp * H,
        transcendentals=0,
        bytes_accessed=(B * Kp + Kp * H) * itemsize + 4 * k_shards * B * H,
    )
    h_parts = pl.pallas_call(
        functools.partial(_partial_fc1_kernel, tk=tk, steps=steps),
        out_shape=jax.ShapeDtypeStruct((k_shards, B, H), jnp.float32),
        grid=(k_shards, steps),
        in_specs=[
            pl.BlockSpec((B, Kp), lambda c, k: (0, 0)),           # x (VMEM-resident)
            _maybe_buffered_spec((tk, H),
                                 lambda c, k: (c * steps + k, 0), w1_buffers),
        ],
        out_specs=pl.BlockSpec((None, B, H), lambda c, k: (c, 0, 0)),
        scratch_shapes=[pltpu.VMEM((B, H), jnp.float32)],
        compiler_params=cparams(("parallel", "arbitrary")),
        cost_estimate=cost_partial,
    )(x_s, w1)

    # The (k_shards, B, H) combine is ~8 KB; a second pallas_call launch would
    # cost more than the reduce itself, so finish in plain XLA.
    h = jnp.maximum(jnp.sum(h_parts, axis=0) + b1, 0.0)
    out = jnp.sum(h * w2, axis=-1, keepdims=True) + b2
    return out.astype(out_dtype)


if __name__ == "__main__":
    # Small stand-in shapes; input_size deliberately NOT 128-aligned so the
    # padding path (needed for the real 36975) is exercised.
    batch = 8
    input_size = 777
    hidden_size = 128
    output_size = 1

    key = jax.random.PRNGKey(0)
    kx, k1, k2, k3, k4 = jax.random.split(key, 5)

    x = jax.random.normal(kx, (batch, input_size), dtype=jnp.float32)

    # PyTorch-style uniform(-1/sqrt(fan_in), 1/sqrt(fan_in)) init.
    s1 = 1.0 / jnp.sqrt(jnp.float32(input_size))
    s2 = 1.0 / jnp.sqrt(jnp.float32(hidden_size))
    w1_t = jax.random.uniform(k1, (input_size, hidden_size), jnp.float32, -s1, s1)
    b1 = jax.random.uniform(k2, (hidden_size,), jnp.float32, -s1, s1)
    w2_t = jax.random.uniform(k3, (hidden_size, output_size), jnp.float32, -s2, s2)
    b2 = jax.random.uniform(k4, (output_size,), jnp.float32, -s2, s2)

    def ref_forward(xx, ww1):
        h = jnp.maximum(
            jnp.dot(xx, ww1, precision=jax.lax.Precision.HIGHEST) + b1, 0.0)
        return jnp.dot(h, w2_t, precision=jax.lax.Precision.HIGHEST) + b2

    ref_f32 = ref_forward(x, w1_t)
    ref_bf16 = ref_forward(x.astype(jnp.bfloat16).astype(jnp.float32),
                           w1_t.astype(jnp.bfloat16).astype(jnp.float32))

    # 1) f32 streaming, single fused kernel, multi-step K accumulation + pad.
    p_f32 = prepare_weights(w1_t, b1, w2_t, b2, tk=256,
                            stream_dtype=jnp.float32, k_shards=1)
    out_f32 = jax.block_until_ready(binary_classifier_forward(x, p_f32))
    assert out_f32.shape == (batch, output_size)
    assert jnp.allclose(out_f32, ref_f32, atol=1e-3, rtol=1e-3)

    # 2) Default fast path: bf16 streaming, large K tile, k_shards auto
    #    (2 on v7x).  Checked against a reference computed from the same
    #    bf16-cast operands (deliberate precision change vs. f32 PyTorch).
    p_fast = prepare_weights(w1_t, b1, w2_t, b2)
    out_bf16 = jax.block_until_ready(binary_classifier_forward(x, p_fast))
    assert out_bf16.shape == (batch, output_size)
    assert jnp.allclose(out_bf16, ref_bf16, atol=2e-2, rtol=2e-2)

    # 3) Explicit dual-TensorCore K split + jnp combine (runs fine, just
    #    serially, on 1-TC chips like v5e/v6e).
    p_split = prepare_weights(w1_t, b1, w2_t, b2, tk=256,
                              stream_dtype=jnp.float32, k_shards=2)
    out_split = jax.block_until_ready(binary_classifier_forward(x, p_split))
    assert jnp.allclose(out_split, ref_f32, atol=1e-3, rtol=1e-3)

    print("KERNEL_OK")
</pallas_src>

<mosaic_0001>
module attributes {stable_mosaic.version = 11 : i64} {
  func.func @_fused_mlp_kernel(%arg0: i32, %arg1: memref<8x1024xf32, #tpu.memory_space<vmem>>, %arg2: memref<256x128xf32, #tpu.memory_space<vmem>>, %arg3: memref<1x128xf32, #tpu.memory_space<vmem>>, %arg4: memref<1x128xf32, #tpu.memory_space<vmem>>, %arg5: memref<1x1xf32, #tpu.memory_space<vmem>>, %arg6: memref<8x1xf32, #tpu.memory_space<vmem>>, %arg7: memref<8x128xf32, #tpu.memory_space<vmem>>) attributes {dimension_semantics = [#tpu.dimension_semantics<arbitrary>], iteration_bounds = array<i64: 4>, scalar_prefetch = 0 : i64, scratch_operands = 1 : i64, tpu.core_type = #tpu.core_type<tc>, window_params = [{pipeline_mode = #tpu.pipeline_mode<synchronous>, transform_indices = @transform_0, window_bounds = array<i64: 8, 1024>}, {transform_indices = @transform_1, window_bounds = array<i64: 256, 128>}, {pipeline_mode = #tpu.pipeline_mode<synchronous>, transform_indices = @transform_2, window_bounds = array<i64: 1, 128>}, {pipeline_mode = #tpu.pipeline_mode<synchronous>, transform_indices = @transform_3, window_bounds = array<i64: 1, 128>}, {pipeline_mode = #tpu.pipeline_mode<synchronous>, transform_indices = @transform_4, window_bounds = array<i64: 1, 1>}, {pipeline_mode = #tpu.pipeline_mode<synchronous>, transform_indices = @transform_5, window_bounds = array<i64: 8, 1>}]} {
    %c0_i32 = arith.constant 0 : i32
    %0 = arith.cmpi eq, %arg0, %c0_i32 : i32
    %1 = arith.extui %0 : i1 to i32
    %c0_i32_0 = arith.constant 0 : i32
    %2 = arith.cmpi ne, %1, %c0_i32_0 : i32
    scf.if %2 {
      %cst_8 = arith.constant 0.000000e+00 : f32
      %15 = vector.broadcast %cst_8 : f32 to vector<8x128xf32>
      %c0_9 = arith.constant 0 : index
      %c0_10 = arith.constant 0 : index
      %16 = vector.load %arg7[%c0_9, %c0_10] : memref<8x128xf32, #tpu.memory_space<vmem>>, vector<8x128xf32>
      tpu.vector_store %arg7[%c0_9, %c0_10], %15 {strides = array<i32>} : memref<8x128xf32, #tpu.memory_space<vmem>>, vector<8x128xf32>,
    } else {
    }
    %c256_i32 = arith.constant 256 : i32
    %3 = arith.muli %arg0, %c256_i32 : i32
    %4 = tpu.assume_multiple %3, 128 : i32
    %c0 = arith.constant 0 : index
    %c0_1 = arith.constant 0 : index
    %5 = vector.load %arg7[%c0, %c0_1] : memref<8x128xf32, #tpu.memory_space<vmem>>, vector<8x128xf32>
    %c0_2 = arith.constant 0 : index
    %6 = arith.index_cast %4 : i32 to index
    %7 = vector.load %arg1[%c0_2, %6] : memref<8x1024xf32, #tpu.memory_space<vmem>>, vector<8x256xf32>
    %c0_3 = arith.constant 0 : index
    %c0_4 = arith.constant 0 : index
    %8 = vector.load %arg2[%c0_3, %c0_4] : memref<256x128xf32, #tpu.memory_space<vmem>>, vector<256x128xf32>
    %cst = arith.constant dense<0.000000e+00> : vector<8x128xf32>
    %9 = tpu.matmul %7, %8, %cst {dimension_numbers = #tpu.dot_dimension_numbers<[1], [0], [0], [1], [0, 0, 1, 1], [], []>} : vector<8x256xf32>, vector<256x128xf32>, vector<8x128xf32> -> vector<8x128xf32>
    %10 = arith.addf %5, %9 : vector<8x128xf32>
    %c0_5 = arith.constant 0 : index
    %c0_6 = arith.constant 0 : index
    %11 = vector.load %arg7[%c0_5, %c0_6] : memref<8x128xf32, #tpu.memory_space<vmem>>, vector<8x128xf32>
    tpu.vector_store %arg7[%c0_5, %c0_6], %10 {strides = array<i32>} : memref<8x128xf32, #tpu.memory_space<vmem>>, vector<8x128xf32>,
    %c3_i32 = arith.constant 3 : i32
    %12 = arith.cmpi eq, %arg0, %c3_i32 : i32
    %13 = arith.extui %12 : i1 to i32
    %c0_i32_7 = arith.constant 0 : i32
    %14 = arith.cmpi ne, %13, %c0_i32_7 : i32
    scf.if %14 {
      %c0_8 = arith.constant 0 : index
      %c0_9 = arith.constant 0 : index
      %15 = vector.load %arg7[%c0_8, %c0_9] : memref<8x128xf32, #tpu.memory_space<vmem>>, vector<8x128xf32>
      %c0_10 = arith.constant 0 : index
      %c0_11 = arith.constant 0 : index
      %16 = vector.load %arg3[%c0_10, %c0_11] : memref<1x128xf32, #tpu.memory_space<vmem>>, vector<1x128xf32>
      %17 = vector.broadcast %16 : vector<1x128xf32> to vector<8x128xf32>
      %18 = arith.addf %15, %17 : vector<8x128xf32>
      %cst_12 = arith.constant 0.000000e+00 : f32
      %19 = vector.broadcast %cst_12 : f32 to vector<8x128xf32>
      %20 = arith.maximumf %18, %19 : vector<8x128xf32>
      %c0_13 = arith.constant 0 : index
      %c0_14 = arith.constant 0 : index
      %21 = vector.load %arg4[%c0_13, %c0_14] : memref<1x128xf32, #tpu.memory_space<vmem>>, vector<1x128xf32>
      %22 = vector.broadcast %21 : vector<1x128xf32> to vector<8x128xf32>
      %23 = arith.mulf %20, %22 : vector<8x128xf32>
      %cst_15 = arith.constant dense<0.000000e+00> : vector<8xf32>
      %24 = vector.multi_reduction <add>, %23, %cst_15 [1] : vector<8x128xf32> to vector<8xf32>
      %25 = vector.shape_cast %24 : vector<8xf32> to vector<8x1xf32>
      %c0_16 = arith.constant 0 : index
      %c0_17 = arith.constant 0 : index
      %26 = vector.load %arg5[%c0_16, %c0_17] : memref<1x1xf32, #tpu.memory_space<vmem>>, vector<1x1xf32>
      %27 = vector.broadcast %26 : vector<1x1xf32> to vector<8x1xf32>
      %28 = arith.addf %25, %27 : vector<8x1xf32>
      %c0_18 = arith.constant 0 : index
      %c0_19 = arith.constant 0 : index
      %29 = vector.load %arg6[%c0_18, %c0_19] : memref<8x1xf32, #tpu.memory_space<vmem>>, vector<8x1xf32>
      tpu.vector_store %arg6[%c0_18, %c0_19], %28 {strides = array<i32>} : memref<8x1xf32, #tpu.memory_space<vmem>>, vector<8x1xf32>,
    } else {
    }
    return
  }
  func.func @transform_0(%arg0: i32) -> (i32, i32) {
    %c0_i32 = arith.constant 0 : i32
    %c0_i32_0 = arith.constant 0 : i32
    %c0_i32_1 = arith.constant 0 : i32
    return %c0_i32, %c0_i32_0 : i32, i32
  }
  func.func @transform_1(%arg0: i32) -> (i32, i32) {
    %c0_i32 = arith.constant 0 : i32
    %c0_i32_0 = arith.constant 0 : i32
    return %arg0, %c0_i32 : i32, i32
  }
  func.func @transform_2(%arg0: i32) -> (i32, i32) {
    %c0_i32 = arith.constant 0 : i32
    %c0_i32_0 = arith.constant 0 : i32
    %c0_i32_1 = arith.constant 0 : i32
    return %c0_i32, %c0_i32_0 : i32, i32
  }
  func.func @transform_3(%arg0: i32) -> (i32, i32) {
    %c0_i32 = arith.constant 0 : i32
    %c0_i32_0 = arith.constant 0 : i32
    %c0_i32_1 = arith.constant 0 : i32
    return %c0_i32, %c0_i32_0 : i32, i32
  }
  func.func @transform_4(%arg0: i32) -> (i32, i32) {
    %c0_i32 = arith.constant 0 : i32
    %c0_i32_0 = arith.constant 0 : i32
    %c0_i32_1 = arith.constant 0 : i32
    return %c0_i32, %c0_i32_0 : i32, i32
  }
  func.func @transform_5(%arg0: i32) -> (i32, i32) {
    %c0_i32 = arith.constant 0 : i32
    %c0_i32_0 = arith.constant 0 : i32
    %c0_i32_1 = arith.constant 0 : i32
    return %c0_i32, %c0_i32_0 : i32, i32
  }
}

</mosaic_0001>

<llo_original>
// kernel: tpu_custom_call.1
$region0: #{tpu_custom_call.1}
  #allocation0 [shape = 'u32[]', space=smem, size = 0x4, offset = 0x4, fixed_abs, tag = 'smem constant byte address 0x4 - core index']
  #allocation1 [shape = 'u32[144,128]{1,0:T(1,128)}', space=vmem, size = 0x12000, scoped, tag = 'internal scratch']
  #allocation2 [shape = 'f32[8,128]{1,0:T(8,128)}', space=vmem, size = 0x1000, scoped, tag = 'scratch operand']
  #allocation3 [shape = 'f32[1,1]{1,0:T(1,128)S(1)}', space=vmem, size = 0x200, scoped, tag = 'scoped memory for tpu_custom_call.1']
  %s0 = inlined_call_operand.hbm [shape: f32[8,1024], index: 0, kind: input, shape index: {}]
  %s1 = inlined_call_operand.hbm [shape: f32[1024,128], index: 1, kind: input, shape index: {}]
  %s2 = inlined_call_operand.vmem [shape: f32[1,128], index: 2, kind: input, shape index: {}]
  %s3 = inlined_call_operand.vmem [shape: f32[1,128], index: 3, kind: input, shape index: {}]
  %s4 = inlined_call_operand.<no memory space> [shape: f32[1,1], index: 4, kind: input, shape index: {}]
  %s5 = inlined_call_operand.vmem [shape: f32[8,1], index: 5, kind: output, shape index: {}]
  %s6 = sld [smem:[#allocation0]]
  $region69: #{tpu_custom_call.1} parent=0
    _
  %s8 = ssub.s32 1, %s6
  %s9 = scalar_select 0, %s8, %s6
  %v10 = vstv %s4
  %11 = vst [vmem:[#allocation3] sm:$0x1] %v10
  $region1: #{tpu_custom_call.1} parent=0
    #allocation4 [shape = 'u8[32768]{0}', space=vmem, size = 0x8000, scoped, tag = 'input window, operand 0, single buffered']
    #allocation5 [shape = 's32[2]{0}', space=sflag, size = 0x8, scoped, tag = 'scoped memory for tpu_custom_call.1']
    #allocation6 [shape = 'u8[262144]{0}', space=vmem, size = 0x40000, scoped, tag = 'input window, operand 1']
    #allocation7 [shape = 's32[2]{0}', space=sflag, size = 0x8, scoped, tag = 'scoped memory for tpu_custom_call.1']
    %12 = vsyncpa [#allocation5], 0
    %13 = vsyncpa [#allocation7], 0
    %s14 = scalar_lea.sflag [#allocation7], 1
    %15 = vsyncpa %s14, 0
    loop: start=0, step=1, limit=6
    $region2: #{tpu_custom_call.1} parent=1 // loop_pre_header
      _
    $region3: #{tpu_custom_call.1} parent=1 // loop_header
      %s17 = sphi 0, %s21
      %p18 = scmp.ge.s32.totalorder %s17, 6
      %s25 = sphi 0, %s25
      %s27 = sphi 0, %s25
      %s28 = sphi 0, %s27
      %s42 = sphi 0, %s28
      %s48 = sphi 0, %s50
      %s51 = sphi 0, %s48
      %s52 = sphi 0, %s51
      %s68 = sphi 0, %s52
      %s72 = sphi 0, %s72
      %s74 = sphi 0, %s72
      %s75 = sphi 0, %s74
      %s89 = sphi 0, %s75
      %s93 = sphi 0, %s93
      %s95 = sphi 0, %s93
      %s96 = sphi 0, %s95
      %s110 = sphi 0, %s96
      %s114 = sphi 0, %s114
      %s116 = sphi 0, %s114
      %s117 = sphi 0, %s116
      %s131 = sphi 0, %s117
      %s135 = sphi 0, %s135
      %s137 = sphi 0, %s135
      %s138 = sphi 0, %s137
      %s152 = sphi 0, %s138
    $region4: #{tpu_custom_call.1} parent=1 // loop_header_branch
      %20 = sbr.rel (%p18) target = $region8
    $region5: #{tpu_custom_call.1} parent=1 // loop_body
      %s22 = ssub.s32 %s17, 1
      %s23 = ssub.s32 %s17, 2
      %s24 = sadd.s32 %s17, 1
      %s26 = sadd.s32 %s25, 1
      %p29 = scmp.eq.s32.totalorder %s17, 3
      %p30 = scmp.ne.s32.totalorder %s25, %s27
      %p31 = scmp.eq.s32.totalorder %s17, 0
      %p32 = por %p30, %p31
      %p33 = scmp.ne.s32.totalorder %s25, %s27
      %p34 = scmp.eq.s32.totalorder %s22, 3
      %p35 = por %p33, %p34
      %p36 = scmp.ne.s32.totalorder %s27, %s28
      %p37 = scmp.eq.s32.totalorder %s22, 0
      %p38 = por %p36, %p37
      %p39 = scmp.ne.s32.totalorder %s27, %s28
      %p40 = scmp.eq.s32.totalorder %s23, 3
      %p41 = por %p39, %p40
      %p43 = scmp.ne.s32.totalorder %s28, %s42
      %p44 = scmp.eq.s32.totalorder %s23, 0
      %p45 = por %p43, %p44
      %s46 = ssub.s32 %s17, %s24
      %p47 = scmp.eq.s32.totalorder %s46, 0
      %s49 = sadd.s32 %s48, 1
      %s50 = scalar_select %p47, %s48, %s49
      %p53 = pneg %p47
      %p54 = scmp.eq.s32.totalorder %s17, 3
      %p55 = por %p53, %p54
      %p56 = scmp.ne.s32.totalorder %s48, %s51
      %p57 = scmp.eq.s32.totalorder %s17, 0
      %p58 = por %p56, %p57
      %p59 = scmp.ne.s32.totalorder %s48, %s51
      %p60 = scmp.eq.s32.totalorder %s22, 3
      %p61 = por %p59, %p60
      %p62 = scmp.ne.s32.totalorder %s51, %s52
      %p63 = scmp.eq.s32.totalorder %s22, 0
      %p64 = por %p62, %p63
      %p65 = scmp.ne.s32.totalorder %s51, %s52
      %p66 = scmp.eq.s32.totalorder %s23, 3
      %p67 = por %p65, %p66
      %p69 = scmp.ne.s32.totalorder %s52, %s68
      %p70 = scmp.eq.s32.totalorder %s23, 0
      %p71 = por %p69, %p70
      %s73 = sadd.s32 %s72, 1
      %p76 = scmp.eq.s32.totalorder %s17, 3
      %p77 = scmp.ne.s32.totalorder %s72, %s74
      %p78 = scmp.eq.s32.totalorder %s17, 0
      %p79 = por %p77, %p78
      %p80 = scmp.ne.s32.totalorder %s72, %s74
      %p81 = scmp.eq.s32.totalorder %s22, 3
      %p82 = por %p80, %p81
      %p83 = scmp.ne.s32.totalorder %s74, %s75
      %p84 = scmp.eq.s32.totalorder %s22, 0
      %p85 = por %p83, %p84
      %p86 = scmp.ne.s32.totalorder %s74, %s75
      %p87 = scmp.eq.s32.totalorder %s23, 3
      %p88 = por %p86, %p87
      %p90 = scmp.ne.s32.totalorder %s75, %s89
      %p91 = scmp.eq.s32.totalorder %s23, 0
      %p92 = por %p90, %p91
      %s94 = sadd.s32 %s93, 1
      %p97 = scmp.eq.s32.totalorder %s17, 3
      %p98 = scmp.ne.s32.totalorder %s93, %s95
      %p99 = scmp.eq.s32.totalorder %s17, 0
      %p100 = por %p98, %p99
      %p101 = scmp.ne.s32.totalorder %s93, %s95
      %p102 = scmp.eq.s32.totalorder %s22, 3
      %p103 = por %p101, %p102
      %p104 = scmp.ne.s32.totalorder %s95, %s96
      %p105 = scmp.eq.s32.totalorder %s22, 0
      %p106 = por %p104, %p105
      %p107 = scmp.ne.s32.totalorder %s95, %s96
      %p108 = scmp.eq.s32.totalorder %s23, 3
      %p109 = por %p107, %p108
      %p111 = scmp.ne.s32.totalorder %s96, %s110
      %p112 = scmp.eq.s32.totalorder %s23, 0
      %p113 = por %p111, %p112
      %s115 = sadd.s32 %s114, 1
      %p118 = scmp.eq.s32.totalorder %s17, 3
      %p119 = scmp.ne.s32.totalorder %s114, %s116
      %p120 = scmp.eq.s32.totalorder %s17, 0
      %p121 = por %p119, %p120
      %p122 = scmp.ne.s32.totalorder %s114, %s116
      %p123 = scmp.eq.s32.totalorder %s22, 3
      %p124 = por %p122, %p123
      %p125 = scmp.ne.s32.totalorder %s116, %s117
      %p126 = scmp.eq.s32.totalorder %s22, 0
      %p127 = por %p125, %p126
      %p128 = scmp.ne.s32.totalorder %s116, %s117
      %p129 = scmp.eq.s32.totalorder %s23, 3
      %p130 = por %p128, %p129
      %p132 = scmp.ne.s32.totalorder %s117, %s131
      %p133 = scmp.eq.s32.totalorder %s23, 0
      %p134 = por %p132, %p133
      %s136 = sadd.s32 %s135, 1
      %p139 = scmp.eq.s32.totalorder %s17, 3
      %p140 = scmp.ne.s32.totalorder %s135, %s137
      %p141 = scmp.eq.s32.totalorder %s17, 0
      %p142 = por %p140, %p141
      %p143 = scmp.ne.s32.totalorder %s135, %s137
      %p144 = scmp.eq.s32.totalorder %s22, 3
      %p145 = por %p143, %p144
      %p146 = scmp.ne.s32.totalorder %s137, %s138
      %p147 = scmp.eq.s32.totalorder %s22, 0
      %p148 = por %p146, %p147
      %p149 = scmp.ne.s32.totalorder %s137, %s138
      %p150 = scmp.eq.s32.totalorder %s23, 3
      %p151 = por %p149, %p150
      %p153 = scmp.ne.s32.totalorder %s138, %s152
      %p154 = scmp.eq.s32.totalorder %s23, 0
      %p155 = por %p153, %p154
      %p156 = scmp.le.s32.totalorder 1, %s17
      %p157 = scmp.lt.s32.totalorder %s17, 5
      %p158 = pnand %p156, %p157
      %p159 = pneg %p158
      // Predicated region
      $region9: #{tpu_custom_call.1} parent=5 // pred_check
        _
      $region10: #{tpu_custom_call.1} parent=5 // pred_check_branch
        %161 = sbr.rel (%p158) target = $region12
      $region11: #{tpu_custom_call.1} parent=5 // pred_region
        %s162 = ssub.s32 %s17, 1
        // Predicated region
        $region13: #{tpu_custom_call.1} parent=11 // pred_check
          %p163 = pneg %p38
        $region14: #{tpu_custom_call.1} parent=11 // pred_check_branch
          %165 = sbr.rel (%p163) target = $region16
        $region15: #{tpu_custom_call.1} parent=11 // pred_region
          %s167 = ssub.s32 1024, 1024
          %168 = vsyncadd [#allocation5], %s167
          %s170 = sshll.u32 [#allocation4], 4
          %s171 = int_to_ptr.vmem [resolvable:$true] %s170
          %173 = dma.hbm_to_vmem [thread:$0]  %s0, 1024, %s171, [#allocation5]
        $region16: #{tpu_custom_call.1} parent=11 // pred_fallthru
          _
        // Predicated region
        $region17: #{tpu_custom_call.1} parent=11 // pred_check
          %p174 = pneg %p85
        $region18: #{tpu_custom_call.1} parent=11 // pred_check_branch
          %176 = sbr.rel (%p174) target = $region20
        $region19: #{tpu_custom_call.1} parent=11 // pred_region
          _
        $region20: #{tpu_custom_call.1} parent=11 // pred_fallthru
          _
        // Predicated region
        $region21: #{tpu_custom_call.1} parent=11 // pred_check
          %p177 = pneg %p106
        $region22: #{tpu_custom_call.1} parent=11 // pred_check_branch
          %179 = sbr.rel (%p177) target = $region24
        $region23: #{tpu_custom_call.1} parent=11 // pred_region
          _
        $region24: #{tpu_custom_call.1} parent=11 // pred_fallthru
          _
        // Predicated region
        $region25: #{tpu_custom_call.1} parent=11 // pred_check
          %p180 = pneg %p127
        $region26: #{tpu_custom_call.1} parent=11 // pred_check_branch
          %182 = sbr.rel (%p180) target = $region28
        $region27: #{tpu_custom_call.1} parent=11 // pred_region
          _
        $region28: #{tpu_custom_call.1} parent=11 // pred_fallthru
          _
      $region12: #{tpu_custom_call.1} parent=5 // pred_fallthru
        _
      %p183 = scmp.lt.s32.totalorder %s17, 4
      // Predicated region
      $region29: #{tpu_custom_call.1} parent=5 // pred_check
        %p184 = pneg %p183
      $region30: #{tpu_custom_call.1} parent=5 // pred_check_branch
        %186 = sbr.rel (%p184) target = $region32
      $region31: #{tpu_custom_call.1} parent=5 // pred_region
        // Predicated region
        $region33: #{tpu_custom_call.1} parent=31 // pred_check
          %p187 = pneg %p58
        $region34: #{tpu_custom_call.1} parent=31 // pred_check_branch
          %189 = sbr.rel (%p187) target = $region36
        $region35: #{tpu_custom_call.1} parent=31 // pred_region
          %s190 = sand.u32 %s48, 1
          %s191 = scalar_lea.sflag [#allocation7], %s190
          %s192 = sand.u32 %s48, 1
          %s193 = smul.addr %s192, 256
          %s194 = scalar_lea.vmem [#allocation6], %s193
          %s195 = smul.u32 32, %s17
          %s197 = ssub.s32 4096, 4096
          %198 = vsyncadd %s191, %s197
          %s199 = smul.addr %s195, 128
          %s200 = scalar_lea.hbm %s1, %s199
          %s201 = sshll.u32 %s194, 4
          %s202 = int_to_ptr.vmem [resolvable:$true] %s201
          %207 = dma.hbm_to_vmem [thread:$0]  %s200, 4096, %s202, %s191, 128, 128, 8
        $region36: #{tpu_custom_call.1} parent=31 // pred_fallthru
          _
      $region32: #{tpu_custom_call.1} parent=5 // pred_fallthru
        _
      %p208 = scmp.le.s32.totalorder 1, %s17
      %p209 = scmp.lt.s32.totalorder %s17, 5
      %p210 = pnand %p208, %p209
      %p211 = pneg %p210
      // Predicated region
      $region37: #{tpu_custom_call.1} parent=5 // pred_check
        _
      $region38: #{tpu_custom_call.1} parent=5 // pred_check_branch
        %213 = sbr.rel (%p210) target = $region40
      $region39: #{tpu_custom_call.1} parent=5 // pred_region
        %s214 = ssub.s32 %s17, 1
        // Predicated region
        $region41: #{tpu_custom_call.1} parent=39 // pred_check
          %p215 = pneg %p38
        $region42: #{tpu_custom_call.1} parent=39 // pred_check_branch
          %217 = sbr.rel (%p215) target = $region44
        $region43: #{tpu_custom_call.1} parent=39 // pred_region
          %218 = dma.done [#allocation5], 1024
        $region44: #{tpu_custom_call.1} parent=39 // pred_fallthru
          _
        %s219 = sand.u32 %s51, 1
        %s220 = scalar_lea.sflag [#allocation7], %s219
        %s221 = sand.u32 %s51, 1
        %s222 = smul.addr %s221, 256
        %s223 = scalar_lea.vmem [#allocation6], %s222
        // Predicated region
        $region45: #{tpu_custom_call.1} parent=39 // pred_check
          %p224 = pneg %p64
        $region46: #{tpu_custom_call.1} parent=39 // pred_check_branch
          %226 = sbr.rel (%p224) target = $region48
        $region47: #{tpu_custom_call.1} parent=39 // pred_region
          %227 = dma.done %s220, 4096
        $region48: #{tpu_custom_call.1} parent=39 // pred_fallthru
          _
        %p228 = pneg %p38
        %p229 = pneg %p35
        %s230 = sand.u32 %s51, 1
        %s231 = scalar_lea.sflag [#allocation7], %s230
        %s232 = sand.u32 %s51, 1
        %s233 = smul.addr %s232, 256
        %s234 = scalar_lea.vmem [#allocation6], %s233
        %p235 = pneg %p64
        %p236 = pneg %p61
        %p237 = pneg %p85
        %p238 = pneg %p82
        %p239 = pneg %p106
        %p240 = pneg %p103
        %p241 = pneg %p127
        %p242 = pneg %p124
        %p243 = pneg %p148
        %p244 = pneg %p145
        %s245 = smul.u32 32, %s22
        %p246 = scmp.eq.s32.totalorder %s22, 0
        // Predicated region
        $region49: #{tpu_custom_call.1} parent=39 // pred_check
          %p247 = pneg %p246
        $region50: #{tpu_custom_call.1} parent=39 // pred_check_branch
          %249 = sbr.rel (%p247) target = $region52
        $region51: #{tpu_custom_call.1} parent=39 // pred_region
          %250 = vst [vmem:[#allocation2] sm:$0xff] 0.0
        $region52: #{tpu_custom_call.1} parent=39 // pred_fallthru
          _
        %s251 = smul.u32 %s22, 256
        %v252 = vld [vmem:[#allocation2] sm:$0xff]
        %s253 = sshra.s32 %s251, 7
        %s254 = sand.u32 %s251, 127
        %s255 = smul.addr %s253, 8
        %s256 = scalar_lea.vmem [#allocation4], %s255
        %v257 = vld [vmem:[%s256] sm:$0xff]
        %v258 = vld [vmem:[%s256 + $0x8] sm:$0xff]
        %v259 = vld [vmem:[%s223] sm:$0xff]
        %v260 = vld [vmem:[%s223 + $0x8] sm:$0xff]
        %v261 = vld [vmem:[%s223 + $0x10] sm:$0xff]
        %v262 = vld [vmem:[%s223 + $0x18] sm:$0xff]
        %v263 = vld [vmem:[%s223 + $0x20] sm:$0xff]
        %v264 = vld [vmem:[%s223 + $0x28] sm:$0xff]
        %v265 = vld [vmem:[%s223 + $0x30] sm:$0xff]
        %v266 = vld [vmem:[%s223 + $0x38] sm:$0xff]
        %v267 = vld [vmem:[%s223 + $0x40] sm:$0xff]
        %v268 = vld [vmem:[%s223 + $0x48] sm:$0xff]
        %v269 = vld [vmem:[%s223 + $0x50] sm:$0xff]
        %v270 = vld [vmem:[%s223 + $0x58] sm:$0xff]
        %v271 = vld [vmem:[%s223 + $0x60] sm:$0xff]
        %v272 = vld [vmem:[%s223 + $0x68] sm:$0xff]
        %v273 = vld [vmem:[%s223 + $0x70] sm:$0xff]
        %v274 = vld [vmem:[%s223 + $0x78] sm:$0xff]
        %v275 = vld [vmem:[%s223 + $0x80] sm:$0xff]
        %v276 = vld [vmem:[%s223 + $0x88] sm:$0xff]
        %v277 = vld [vmem:[%s223 + $0x90] sm:$0xff]
        %v278 = vld [vmem:[%s223 + $0x98] sm:$0xff]
        %v279 = vld [vmem:[%s223 + $0xa0] sm:$0xff]
        %v280 = vld [vmem:[%s223 + $0xa8] sm:$0xff]
        %v281 = vld [vmem:[%s223 + $0xb0] sm:$0xff]
        %v282 = vld [vmem:[%s223 + $0xb8] sm:$0xff]
        %v283 = vld [vmem:[%s223 + $0xc0] sm:$0xff]
        %v284 = vld [vmem:[%s223 + $0xc8] sm:$0xff]
        %v285 = vld [vmem:[%s223 + $0xd0] sm:$0xff]
        %v286 = vld [vmem:[%s223 + $0xd8] sm:$0xff]
        %v287 = vld [vmem:[%s223 + $0xe0] sm:$0xff]
        %v288 = vld [vmem:[%s223 + $0xe8] sm:$0xff]
        %v289 = vld [vmem:[%s223 + $0xf0] sm:$0xff]
        %v290 = vld [vmem:[%s223 + $0xf8] sm:$0xff]
        %291 = vmatprep.subr.mxu0 0.0
        %292 = vmatpush1.msra.mxu0 %v259
        %293 = vmatprep.subr.mxu0 0.0
        %294 = vmatpush1.msra.mxu0 %v260
        %295 = vmatprep.subr.mxu0 0.0
        %296 = vmatpush1.msra.mxu0 %v261
        %297 = vmatprep.subr.mxu0 0.0
        %298 = vmatpush1.msra.mxu0 %v262
        %299 = vmatprep.subr.mxu0 0.0
        %300 = vmatpush1.msra.mxu0 %v263
        %301 = vmatprep.subr.mxu0 0.0
        %302 = vmatpush1.msra.mxu0 %v264
        %303 = vmatprep.subr.mxu0 0.0
        %304 = vmatpush1.msra.mxu0 %v265
        %305 = vmatprep.subr.mxu0 0.0
        %306 = vmatpush1.msra.mxu0 %v266
        %307 = vmatprep.subr.mxu0 0.0
        %308 = vmatpush1.msra.mxu0 %v267
        %309 = vmatprep.subr.mxu0 0.0
        %310 = vmatpush1.msra.mxu0 %v268
        %311 = vmatprep.subr.mxu0 0.0
        %312 = vmatpush1.msra.mxu0 %v269
        %313 = vmatprep.subr.mxu0 0.0
        %314 = vmatpush1.msra.mxu0 %v270
        %315 = vmatprep.subr.mxu0 0.0
        %316 = vmatpush1.msra.mxu0 %v271
        %317 = vmatprep.subr.mxu0 0.0
        %318 = vmatpush1.msra.mxu0 %v272
        %319 = vmatprep.subr.mxu0 0.0
        %320 = vmatpush1.msra.mxu0 %v273
        %321 = vmatprep.subr.mxu0 0.0
        %322 = vmatpush1.msra.mxu0 %v274
        %323 = vmatprep.subr.mxu0 0.0
        %324 = vmatpush1.msra.mxu0 %v275
        %325 = vmatprep.subr.mxu0 0.0
        %326 = vmatpush1.msra.mxu0 %v276
        %327 = vmatprep.subr.mxu0 0.0
        %328 = vmatpush1.msra.mxu0 %v277
        %329 = vmatprep.subr.mxu0 0.0
        %330 = vmatpush1.msra.mxu0 %v278
        %331 = vmatprep.subr.mxu0 0.0
        %332 = vmatpush1.msra.mxu0 %v279
        %333 = vmatprep.subr.mxu0 0.0
        %334 = vmatpush1.msra.mxu0 %v280
        %335 = vmatprep.subr.mxu0 0.0
        %336 = vmatpush1.msra.mxu0 %v281
        %337 = vmatprep.subr.mxu0 0.0
        %338 = vmatpush1.msra.mxu0 %v282
        %339 = vmatprep.subr.mxu0 0.0
        %340 = vmatpush1.msra.mxu0 %v283
        %341 = vmatprep.subr.mxu0 0.0
        %342 = vmatpush1.msra.mxu0 %v284
        %343 = vmatprep.subr.mxu0 0.0
        %344 = vmatpush1.msra.mxu0 %v285
        %345 = vmatprep.subr.mxu0 0.0
        %346 = vmatpush1.msra.mxu0 %v286
        %347 = vmatprep.subr.mxu0 0.0
        %348 = vmatpush1.msra.mxu0 %v287
        %349 = vmatprep.subr.mxu0 0.0
        %350 = vmatpush1.msra.mxu0 %v288
        %351 = vmatprep.subr.mxu0 0.0
        %352 = vmatpush1.msra.mxu0 %v289
        %353 = vmatprep.subr.mxu0 0.0
        %354 = vmatpush1.msra.mxu0 %v290
        %355 = vmatprep.mubr.f32.mxu0 %v258
        %356 = vmatmul.mubr.f32.gmra.mrb[0].mxu0 %v257
        %v357 = vpop.f32.mrb[0].mxu0
        %v358 = vadd.f32 0.0, %v357
        %v359 = vpop.f32.mrb[0].mxu0
        %360 = vdwg.mxu0
        %v361 = vadd.f32 %v252, %v358
        %362 = vst [vmem:[#allocation2] sm:$0xff] %v361
        %p363 = scmp.eq.s32.totalorder %s22, 3
        // Predicated region
        $region53: #{tpu_custom_call.1} parent=39 // pred_check
          %p364 = pneg %p363
        $region54: #{tpu_custom_call.1} parent=39 // pred_check_branch
          %366 = sbr.rel (%p364) target = $region56
        $region55: #{tpu_custom_call.1} parent=39 // pred_region
          %v367 = vld [vmem:[#allocation2] sm:$0xff]
          %v368 = vld [vmem:[%s2] sm:$0x1]
          %v370 = vlaneseq
          %v371 = vshrl.u32 %v370, 7
          %v372 = vsub.s32 0, %v371
          %v373 = vrot.slane %v368, %v372
          %v375 = vadd.f32 %v367, %v373
          %v376 = vmax.f32 %v375, 0.0
          %v377 = vld [vmem:[%s3] sm:$0x1]
          %v379 = vlaneseq
          %v380 = vshrl.u32 %v379, 7
          %v381 = vsub.s32 0, %v380
          %v382 = vrot.slane %v377, %v381
          %v384 = vmul.f32 %v376, %v382
          %385 = vadd.xlane.f32.xlu0 %v384
          %v386 = vpop.xlane.xlu0 %385
          %v387 = vld [vmem:[#allocation3] sm:$0x1]
          %v389 = vlaneseq
          %v390 = vshrl.u32 %v389, 7
          %v391 = vsub.s32 0, %v390
          %v392 = vrot.slane %v387, %v391
          %v394 = vadd.f32 %v386, %v392
          %vm395 = vcmask 7168
          %396 = vst.msk [vmem:[%s5] sm:$0xff] %vm395, %v394
        $region56: #{tpu_custom_call.1} parent=39 // pred_fallthru
          _
        // Predicated region
        $region57: #{tpu_custom_call.1} parent=39 // pred_check
          %p397 = pneg %p145
        $region58: #{tpu_custom_call.1} parent=39 // pred_check_branch
          %399 = sbr.rel (%p397) target = $region60
        $region59: #{tpu_custom_call.1} parent=39 // pred_region
          _
        $region60: #{tpu_custom_call.1} parent=39 // pred_fallthru
          _
        // Predicated region
        $region61: #{tpu_custom_call.1} parent=39 // pred_check
          %p400 = pneg %p145
        $region62: #{tpu_custom_call.1} parent=39 // pred_check_branch
          %402 = sbr.rel (%p400) target = $region64
        $region63: #{tpu_custom_call.1} parent=39 // pred_region
          _
        $region64: #{tpu_custom_call.1} parent=39 // pred_fallthru
          _
      $region40: #{tpu_custom_call.1} parent=5 // pred_fallthru
        _
      %p403 = scmp.le.s32.totalorder 2, %s17
      // Predicated region
      $region65: #{tpu_custom_call.1} parent=5 // pred_check
        %p404 = pneg %p403
      $region66: #{tpu_custom_call.1} parent=5 // pred_check_branch
        %406 = sbr.rel (%p404) target = $region68
      $region67: #{tpu_custom_call.1} parent=5 // pred_region
        %s407 = ssub.s32 %s17, 2
      $region68: #{tpu_custom_call.1} parent=5 // pred_fallthru
        _
    $region6: #{tpu_custom_call.1} parent=1 // loop_footer
      %s21 = sadd.s32 1, %s17
    $region7: #{tpu_custom_call.1} parent=1 // loop_footer_branch
      %16 = sbr.rel target = $region3
    $region8: #{tpu_custom_call.1} parent=1 // loop_exit
      _
    %408 = vsyncpa [#allocation5], 1
    %s409 = scalar_lea.sflag [#allocation5], 1
    %410 = vsyncpa %s409, 1
    %411 = vsyncpa [#allocation7], 1
    %s412 = scalar_lea.sflag [#allocation7], 1
    %413 = vsyncpa %s412, 1

</llo_original>
